<compile_context>
chip_gen: v7x
topology: tpu7x:2x2x1
jax: 0.10.0
libtpu: 0.0.40
codegen_flags: <defaults>
</compile_context>

<pallas_src>
import jax
import jax.numpy as jnp
from jax import lax
from jax.experimental import pallas as pl
from jax.experimental.pallas import tpu as pltpu


def _gelu_tanh(x):
    # tanh-approx GELU (used both in the kernel and the pure-JAX reference)
    c = 0.7978845608028654  # sqrt(2/pi)
    return 0.5 * x * (1.0 + jnp.tanh(c * (x + 0.044715 * x * x * x)))


def _round_up(x, m):
    return ((x + m - 1) // m) * m


# ----------------------------- Pallas kernel ------------------------------- #

def _moe_expert_kernel(counts_ref, lidx_ref, x_ref, gate_ref, wfc_ref, bfc_ref,
                       wproj_ref, o_ref):
    # grid = (token_tiles ["parallel"], i_tiles ["arbitrary"], experts ["arbitrary"])
    ic = pl.program_id(1)
    e = pl.program_id(2)

    # output block is resident across both reduction axes: zero it once.
    @pl.when(jnp.logical_and(ic == 0, e == 0))
    def _init():
        o_ref[...] = jnp.zeros_like(o_ref)

    # Skip compute for experts that received no tokens (counts in SMEM).  Their
    # weight DMA is also skipped via the lidx-redirected index_maps below.
    @pl.when(counts_ref[e] > 0)
    def _compute():
        x_bf = x_ref[...]                                                # (Tb, H) bf16
        h = jnp.dot(x_bf, wfc_ref[0], preferred_element_type=jnp.float32)
        # c_fc bias in f32, activation in bf16 (the next matmul is bf16 anyway)
        h = _gelu_tanh((h + bfc_ref[0]).astype(jnp.bfloat16))            # (Tb, It) bf16
        y = jnp.dot(h, wproj_ref[0], preferred_element_type=jnp.float32)  # (Tb, H) f32
        g = gate_ref[0]                                                  # (Tb, 1) f32
        o_ref[...] += g * y


# ------------------------------- wrapper ----------------------------------- #

def moe_forward(hidden_states, params, num_experts, top_k,
                token_block=512, i_tile=None):
    """params layout (kernel-ready, prepared once at setup time):
         gate_w   : (H, E)        f32
         c_fc_w   : (E, H, Ifc)   bf16   (in, out layout)
         c_fc_b   : (E, Ifc)      f32
         c_proj_w : (E, Ifc, H)   bf16
         c_proj_b : (E, H)        f32
    """
    orig_shape = hidden_states.shape
    H = orig_shape[-1]
    x = hidden_states.reshape(-1, H).astype(jnp.float32)
    T = x.shape[0]

    # --- routing: tiny (T, E) matmul + top_k + softmax, left to XLA to fuse ---
    router_logits = jnp.dot(x, params["gate_w"].astype(jnp.float32))      # (T, E)
    topk_vals, topk_idx = lax.top_k(router_logits, top_k)                 # (T, K)
    router_weights = jax.nn.softmax(topk_vals.astype(jnp.float32), axis=-1)
    one_hot = jax.nn.one_hot(topk_idx, num_experts, dtype=jnp.float32)    # (T, K, E)
    gates_dense = jnp.einsum("tke,tk->te", one_hot, router_weights)       # (T, E)
    counts = jnp.sum(one_hot, axis=(0, 1)).astype(jnp.int32)              # (E,)

    # --- DMA-skip redirection for empty experts: load_idx[e] = e if expert e has
    #     tokens, else the previously-loaded expert -> unchanged block index ->
    #     Pallas skips the weight copy (expert axis is innermost in the grid). ---
    eidx = jnp.arange(num_experts, dtype=jnp.int32)
    nonempty = counts > 0
    prev = lax.cummax(jnp.where(nonempty, eidx, -1))
    first_ne = jnp.argmax(nonempty).astype(jnp.int32)
    load_idx = jnp.where(prev >= 0, prev, first_ne).astype(jnp.int32)     # (E,)

    w_fc = params["c_fc_w"]                                    # (E, H, Ifc) bf16
    w_proj = params["c_proj_w"]                                # (E, Ifc, H) bf16
    b_fc = params["c_fc_b"][:, None, :].astype(jnp.float32)    # (E, 1, Ifc)
    Ifc = w_fc.shape[2]

    # --- token tiling (parallel axis): t_blk multiple of 16 (bf16 sublanes) ---
    # NOTE: on v7x prefer token_block <= 256 (64 MiB VMEM) and >= 2 token tiles
    # so the parallel axis actually shards across both TensorCores.
    t_blk = min(token_block, _round_up(T, 16))
    t_blk = _round_up(t_blk, 16)
    T_pad = _round_up(T, t_blk)
    pad = T_pad - T
    x_bf16 = jnp.pad(x.astype(jnp.bfloat16), ((0, pad), (0, 0)))          # (T_pad, H)
    gates_p = jnp.pad(gates_dense, ((0, pad), (0, 0)))                    # (T_pad, E)
    gates_t = jnp.transpose(gates_p)[:, :, None]                          # (E, T_pad, 1)

    # --- intermediate-dim tiling (keeps weight chunks inside VMEM budgets) ---
    if i_tile is None:
        i_tile = 512 if (Ifc > 512 and Ifc % 512 == 0) else Ifc
    if Ifc % i_tile != 0:
        i_tile = Ifc
    n_ic = Ifc // i_tile

    grid = (T_pad // t_blk, n_ic, num_experts)

    # explicit scoped-VMEM limit from the (double-buffered) tile footprint
    est = 2 * (t_blk * H * 2          # x (bf16)
               + t_blk * 128 * 4      # gate column (lane-padded)
               + H * i_tile * 2       # c_fc weight chunk (bf16)
               + 8 * i_tile * 4       # c_fc bias chunk (sublane-padded)
               + i_tile * H * 2       # c_proj weight chunk (bf16)
               + t_blk * H * 4)       # resident f32 output block
    vmem_limit = int(min(max(int(est * 1.5), 32 * 1024 * 1024), 64 * 1024 * 1024))

    out_p = pl.pallas_call(
        _moe_expert_kernel,
        out_shape=jax.ShapeDtypeStruct((T_pad, H), jnp.float32),
        grid_spec=pltpu.PrefetchScalarGridSpec(
            num_scalar_prefetch=2,           # per-expert counts + DMA load indices
            grid=grid,
            in_specs=[
                # x: bf16, resident across both reduction axes
                pl.BlockSpec((t_blk, H), lambda t, ic, e, cnt, lidx: (t, 0)),
                # gate column of expert e for this token tile: (t_blk, 1) slab
                pl.BlockSpec((1, t_blk, 1), lambda t, ic, e, cnt, lidx: (e, t, 0)),
                # c_fc weight / bias chunk (redirected for empty experts -> DMA skip)
                pl.BlockSpec((1, H, i_tile),
                             lambda t, ic, e, cnt, lidx: (lidx[e], 0, ic)),
                pl.BlockSpec((1, 1, i_tile),
                             lambda t, ic, e, cnt, lidx: (lidx[e], 0, ic)),
                # c_proj weight chunk (redirected for empty experts -> DMA skip)
                pl.BlockSpec((1, i_tile, H),
                             lambda t, ic, e, cnt, lidx: (lidx[e], ic, 0)),
            ],
            out_specs=pl.BlockSpec((t_blk, H), lambda t, ic, e, cnt, lidx: (t, 0)),
        ),
        compiler_params=pltpu.CompilerParams(
            dimension_semantics=("parallel", "arbitrary", "arbitrary"),
            vmem_limit_bytes=vmem_limit),
    )(counts, load_idx, x_bf16, gates_t, w_fc, b_fc, w_proj)

    # hoisted c_proj bias: sum_e gate[t,e] * b_proj[e]  (exactly the torch semantics)
    out = out_p[:T] + gates_dense @ params["c_proj_b"].astype(jnp.float32)
    out = out.astype(hidden_states.dtype).reshape(orig_shape)
    return out, router_logits


# --------------------------- pure-JAX reference ----------------------------- #

def moe_reference(hidden_states, params, num_experts, top_k):
    orig_shape = hidden_states.shape
    H = orig_shape[-1]
    x = hidden_states.reshape(-1, H).astype(jnp.float32)
    logits = x @ params["gate_w"].astype(jnp.float32)
    vals, idx = lax.top_k(logits, top_k)
    w = jax.nn.softmax(vals.astype(jnp.float32), axis=-1)
    w_fc = params["c_fc_w"].astype(jnp.float32)      # (E, H, Ifc)
    w_pr = params["c_proj_w"].astype(jnp.float32)    # (E, Ifc, H)
    out = jnp.zeros_like(x)
    for k in range(top_k):
        e = idx[:, k]
        h = jnp.einsum("th,thi->ti", x, w_fc[e]) + params["c_fc_b"][e]
        h = _gelu_tanh(h)
        y = jnp.einsum("ti,tih->th", h, w_pr[e]) + params["c_proj_b"][e]
        out = out + w[:, k:k + 1] * y
    return out.reshape(orig_shape), logits


# ---------------------------------- main ------------------------------------ #

if __name__ == "__main__":
    num_experts = 4
    top_k = 2
    hidden_size = 128
    intermediate_size = 128
    is_glu = False
    fc_out = 2 * intermediate_size if is_glu else intermediate_size
    std = 0.02
    batch, seq = 2, 8

    key = jax.random.PRNGKey(0)
    k_x, k_g, k_fc, k_proj = jax.random.split(key, 4)

    # Kernel-ready parameters: (E, in, out) layout, matmul weights bf16,
    # gate / biases f32.  Init matches Experts_Torch: weights ~ N(0, std),
    # biases zeroed (iid-normal init is layout-invariant).
    params = {
        "gate_w": jax.random.normal(k_g, (hidden_size, num_experts), jnp.float32) * std,
        "c_fc_w": (jax.random.normal(
            k_fc, (num_experts, hidden_size, fc_out), jnp.float32) * std
        ).astype(jnp.bfloat16),
        "c_fc_b": jnp.zeros((num_experts, fc_out), jnp.float32),
        "c_proj_w": (jax.random.normal(
            k_proj, (num_experts, fc_out, hidden_size), jnp.float32) * std
        ).astype(jnp.bfloat16),
        "c_proj_b": jnp.zeros((num_experts, hidden_size), jnp.float32),
    }

    x = jax.random.normal(k_x, (batch, seq, hidden_size), jnp.float32)

    fwd = jax.jit(lambda h, p: moe_forward(h, p, num_experts, top_k))
    out, router_logits = fwd(x, params)
    jax.block_until_ready(out)
    jax.block_until_ready(router_logits)

    ref_out, ref_logits = moe_reference(x, params, num_experts, top_k)

    assert out.shape == x.shape
    assert router_logits.shape == (batch * seq, num_experts)
    assert jnp.allclose(router_logits, ref_logits, rtol=5e-3, atol=5e-4), \
        "router logits mismatch"
    # kernel runs bf16 MXU inputs + bf16 GELU vs the f32 reference
    assert jnp.allclose(out, ref_out, rtol=2e-2, atol=2e-3), "MoE output mismatch"

    print("KERNEL_OK")
</pallas_src>

<mosaic_0001>
module attributes {stable_mosaic.version = 11 : i64} {
  func.func @_moe_expert_kernel(%arg0: i32, %arg1: i32, %arg2: i32, %arg3: memref<4xi32, #tpu.memory_space<smem>>, %arg4: memref<4xi32, #tpu.memory_space<smem>>, %arg5: memref<16x128xbf16, #tpu.memory_space<vmem>>, %arg6: memref<1x16x1xf32, #tpu.memory_space<vmem>>, %arg7: memref<1x128x128xbf16, #tpu.memory_space<vmem>>, %arg8: memref<1x1x128xf32, #tpu.memory_space<vmem>>, %arg9: memref<1x128x128xbf16, #tpu.memory_space<vmem>>, %arg10: memref<16x128xf32, #tpu.memory_space<vmem>>) attributes {dimension_semantics = [#tpu.dimension_semantics<parallel>, #tpu.dimension_semantics<arbitrary>, #tpu.dimension_semantics<arbitrary>], iteration_bounds = array<i64: 1, 1, 4>, scalar_prefetch = 2 : i64, scratch_operands = 0 : i64, tpu.core_type = #tpu.core_type<tc>, window_params = [{transform_indices = @transform_0, window_bounds = array<i64: 16, 128>}, {transform_indices = @transform_1, window_bounds = array<i64: 1, 16, 1>}, {transform_indices = @transform_2, window_bounds = array<i64: 1, 128, 128>}, {transform_indices = @transform_3, window_bounds = array<i64: 1, 1, 128>}, {transform_indices = @transform_4, window_bounds = array<i64: 1, 128, 128>}, {transform_indices = @transform_5, window_bounds = array<i64: 16, 128>}]} {
    %c0_i32 = arith.constant 0 : i32
    %0 = arith.cmpi eq, %arg1, %c0_i32 : i32
    %c0_i32_0 = arith.constant 0 : i32
    %1 = arith.cmpi eq, %arg2, %c0_i32_0 : i32
    %2 = arith.andi %0, %1 : i1
    %3 = arith.extui %2 : i1 to i32
    %c0_i32_1 = arith.constant 0 : i32
    %4 = arith.cmpi ne, %3, %c0_i32_1 : i32
    scf.if %4 {
      %cst = arith.constant 0.000000e+00 : f32
      %10 = vector.broadcast %cst : f32 to vector<16x128xf32>
      %c0 = arith.constant 0 : index
      %c0_4 = arith.constant 0 : index
      %11 = vector.load %arg10[%c0, %c0_4] : memref<16x128xf32, #tpu.memory_space<vmem>>, vector<16x128xf32>
      tpu.vector_store %arg10[%c0, %c0_4], %10 {strides = array<i32>} : memref<16x128xf32, #tpu.memory_space<vmem>>, vector<16x128xf32>,
    } else {
    }
    %5 = arith.index_cast %arg2 : i32 to index
    %6 = memref.load %arg3[%5] : memref<4xi32, #tpu.memory_space<smem>>
    %c0_i32_2 = arith.constant 0 : i32
    %7 = arith.cmpi sgt, %6, %c0_i32_2 : i32
    %8 = arith.extui %7 : i1 to i32
    %c0_i32_3 = arith.constant 0 : i32
    %9 = arith.cmpi ne, %8, %c0_i32_3 : i32
    scf.if %9 {
      %c0 = arith.constant 0 : index
      %c0_4 = arith.constant 0 : index
      %10 = vector.load %arg5[%c0, %c0_4] : memref<16x128xbf16, #tpu.memory_space<vmem>>, vector<16x128xbf16>
      %c0_5 = arith.constant 0 : index
      %c0_6 = arith.constant 0 : index
      %c0_7 = arith.constant 0 : index
      %11 = vector.load %arg7[%c0_5, %c0_6, %c0_7] : memref<1x128x128xbf16, #tpu.memory_space<vmem>>, vector<1x128x128xbf16>
      %12 = vector.shape_cast %11 : vector<1x128x128xbf16> to vector<128x128xbf16>
      %cst = arith.constant dense<0.000000e+00> : vector<16x128xf32>
      %13 = tpu.matmul %10, %12, %cst {dimension_numbers = #tpu.dot_dimension_numbers<[1], [0], [0], [1], [0, 0, 1, 1], [], []>} : vector<16x128xbf16>, vector<128x128xbf16>, vector<16x128xf32> -> vector<16x128xf32>
      %c0_8 = arith.constant 0 : index
      %c0_9 = arith.constant 0 : index
      %c0_10 = arith.constant 0 : index
      %14 = vector.load %arg8[%c0_8, %c0_9, %c0_10] : memref<1x1x128xf32, #tpu.memory_space<vmem>>, vector<1x1x128xf32>
      %15 = vector.shape_cast %14 : vector<1x1x128xf32> to vector<1x128xf32>
      %16 = vector.broadcast %15 : vector<1x128xf32> to vector<16x128xf32>
      %17 = arith.addf %13, %16 : vector<16x128xf32>
      %18 = arith.truncf %17 : vector<16x128xf32> to vector<16x128xbf16>
      %cst_11 = arith.constant 5.000000e-01 : bf16
      %19 = vector.broadcast %cst_11 : bf16 to vector<16x128xbf16>
      %20 = arith.mulf %19, %18 : vector<16x128xbf16>
      %cst_12 = arith.constant 4.467770e-02 : bf16
      %21 = vector.broadcast %cst_12 : bf16 to vector<16x128xbf16>
      %22 = arith.mulf %21, %18 : vector<16x128xbf16>
      %23 = arith.mulf %22, %18 : vector<16x128xbf16>
      %24 = arith.mulf %23, %18 : vector<16x128xbf16>
      %25 = arith.addf %18, %24 : vector<16x128xbf16>
      %cst_13 = arith.constant 7.968750e-01 : bf16
      %26 = vector.broadcast %cst_13 : bf16 to vector<16x128xbf16>
      %27 = arith.mulf %26, %25 : vector<16x128xbf16>
      %28 = math.tanh %27 : vector<16x128xbf16>
      %cst_14 = arith.constant 1.000000e+00 : bf16
      %29 = vector.broadcast %cst_14 : bf16 to vector<16x128xbf16>
      %30 = arith.addf %29, %28 : vector<16x128xbf16>
      %31 = arith.mulf %20, %30 : vector<16x128xbf16>
      %c0_15 = arith.constant 0 : index
      %c0_16 = arith.constant 0 : index
      %c0_17 = arith.constant 0 : index
      %32 = vector.load %arg9[%c0_15, %c0_16, %c0_17] : memref<1x128x128xbf16, #tpu.memory_space<vmem>>, vector<1x128x128xbf16>
      %33 = vector.shape_cast %32 : vector<1x128x128xbf16> to vector<128x128xbf16>
      %cst_18 = arith.constant dense<0.000000e+00> : vector<16x128xf32>
      %34 = tpu.matmul %31, %33, %cst_18 {dimension_numbers = #tpu.dot_dimension_numbers<[1], [0], [0], [1], [0, 0, 1, 1], [], []>} : vector<16x128xbf16>, vector<128x128xbf16>, vector<16x128xf32> -> vector<16x128xf32>
      %c0_19 = arith.constant 0 : index
      %c0_20 = arith.constant 0 : index
      %c0_21 = arith.constant 0 : index
      %35 = vector.load %arg6[%c0_19, %c0_20, %c0_21] : memref<1x16x1xf32, #tpu.memory_space<vmem>>, vector<1x16x1xf32>
      %36 = vector.shape_cast %35 : vector<1x16x1xf32> to vector<16x1xf32>
      %c0_22 = arith.constant 0 : index
      %c0_23 = arith.constant 0 : index
      %37 = vector.load %arg10[%c0_22, %c0_23] : memref<16x128xf32, #tpu.memory_space<vmem>>, vector<16x128xf32>
      %38 = vector.broadcast %36 : vector<16x1xf32> to vector<16x128xf32>
      %39 = arith.mulf %38, %34 : vector<16x128xf32>
      %40 = arith.addf %37, %39 : vector<16x128xf32>
      %c0_24 = arith.constant 0 : index
      %c0_25 = arith.constant 0 : index
      %41 = vector.load %arg10[%c0_24, %c0_25] : memref<16x128xf32, #tpu.memory_space<vmem>>, vector<16x128xf32>
      tpu.vector_store %arg10[%c0_24, %c0_25], %40 {strides = array<i32>} : memref<16x128xf32, #tpu.memory_space<vmem>>, vector<16x128xf32>,
    } else {
    }
    return
  }
  func.func @transform_0(%arg0: i32, %arg1: i32, %arg2: i32, %arg3: memref<4xi32, #tpu.memory_space<smem>>, %arg4: memref<4xi32, #tpu.memory_space<smem>>) -> (i32, i32) {
    %c0_i32 = arith.constant 0 : i32
    %c0_i32_0 = arith.constant 0 : i32
    return %arg0, %c0_i32 : i32, i32
  }
  func.func @transform_1(%arg0: i32, %arg1: i32, %arg2: i32, %arg3: memref<4xi32, #tpu.memory_space<smem>>, %arg4: memref<4xi32, #tpu.memory_space<smem>>) -> (i32, i32, i32) {
    %c0_i32 = arith.constant 0 : i32
    %c0_i32_0 = arith.constant 0 : i32
    return %arg2, %arg0, %c0_i32 : i32, i32, i32
  }
  func.func @transform_2(%arg0: i32, %arg1: i32, %arg2: i32, %arg3: memref<4xi32, #tpu.memory_space<smem>>, %arg4: memref<4xi32, #tpu.memory_space<smem>>) -> (i32, i32, i32) {
    %0 = arith.index_cast %arg2 : i32 to index
    %1 = memref.load %arg4[%0] : memref<4xi32, #tpu.memory_space<smem>>
    %c0_i32 = arith.constant 0 : i32
    %c0_i32_0 = arith.constant 0 : i32
    return %1, %c0_i32, %arg1 : i32, i32, i32
  }
  func.func @transform_3(%arg0: i32, %arg1: i32, %arg2: i32, %arg3: memref<4xi32, #tpu.memory_space<smem>>, %arg4: memref<4xi32, #tpu.memory_space<smem>>) -> (i32, i32, i32) {
    %0 = arith.index_cast %arg2 : i32 to index
    %1 = memref.load %arg4[%0] : memref<4xi32, #tpu.memory_space<smem>>
    %c0_i32 = arith.constant 0 : i32
    %c0_i32_0 = arith.constant 0 : i32
    return %1, %c0_i32, %arg1 : i32, i32, i32
  }
  func.func @transform_4(%arg0: i32, %arg1: i32, %arg2: i32, %arg3: memref<4xi32, #tpu.memory_space<smem>>, %arg4: memref<4xi32, #tpu.memory_space<smem>>) -> (i32, i32, i32) {
    %0 = arith.index_cast %arg2 : i32 to index
    %1 = memref.load %arg4[%0] : memref<4xi32, #tpu.memory_space<smem>>
    %c0_i32 = arith.constant 0 : i32
    %c0_i32_0 = arith.constant 0 : i32
    return %1, %arg1, %c0_i32 : i32, i32, i32
  }
  func.func @transform_5(%arg0: i32, %arg1: i32, %arg2: i32, %arg3: memref<4xi32, #tpu.memory_space<smem>>, %arg4: memref<4xi32, #tpu.memory_space<smem>>) -> (i32, i32) {
    %c0_i32 = arith.constant 0 : i32
    %c0_i32_0 = arith.constant 0 : i32
    return %arg0, %c0_i32 : i32, i32
  }
}

</mosaic_0001>

<llo_original>
// kernel: _lambda_.1
$region0: #{_lambda_.1}
  #allocation0 [shape = 'u32[]', space=smem, size = 0x4, offset = 0x4, fixed_abs, tag = 'smem constant byte address 0x4 - core index']
  #allocation1 [shape = 'u32[144,128]{1,0:T(1,128)}', space=vmem, size = 0x12000, scoped, tag = 'internal scratch']
  #allocation2 [shape = 's32[1]{0}', space=sflag, size = 0x4, scoped, tag = 'scoped memory for _lambda_.1']
  #allocation3 [shape = 'u8[512]{0}', space=smem, size = 0x200, scoped, tag = 'prefetched SMEM operand 0']
  #allocation4 [shape = 'u8[512]{0}', space=smem, size = 0x200, scoped, tag = 'prefetched SMEM operand 1']
  %s0 = inlined_call_operand.vmem [shape: s32[4], index: 0, kind: input, shape index: {}]
  %s1 = inlined_call_operand.vmem [shape: s32[4], index: 1, kind: input, shape index: {}]
  %s2 = inlined_call_operand.vmem [shape: bf16[16,128], index: 2, kind: input, shape index: {}]
  %s3 = inlined_call_operand.vmem [shape: f32[4,16,1], index: 3, kind: input, shape index: {}]
  %s4 = inlined_call_operand.hbm [shape: bf16[4,128,128], index: 4, kind: input, shape index: {}]
  %s5 = inlined_call_operand.vmem [shape: f32[4,1,128], index: 5, kind: input, shape index: {}]
  %s6 = inlined_call_operand.hbm [shape: bf16[4,128,128], index: 6, kind: input, shape index: {}]
  %s7 = inlined_call_operand.vmem [shape: f32[16,128], index: 7, kind: output, shape index: {}]
  %s8 = sld [smem:[#allocation0]]
  $region69: #{_lambda_.1} parent=0
    _
  %s10 = ssub.s32 1, %s8
  %s11 = scalar_select 0, %s10, %s8
  %s12 = sshll.u32 %s0, 4
  %s13 = int_to_ptr.vmem [resolvable:$true] %s12
  %15 = dma.vmem_to_smem %s13, 16, [#allocation3], [#allocation2]
  %s16 = sshll.u32 %s1, 4
  %s17 = int_to_ptr.vmem [resolvable:$true] %s16
  %19 = dma.vmem_to_smem %s17, 16, [#allocation4], [#allocation2]
  %20 = dma.done [#allocation2], 32
  %21 = sfence
  $region1: #{_lambda_.1} parent=0
    #allocation5 [shape = 'u8[65536]{0}', space=vmem, size = 0x10000, scoped, tag = 'input window, operand 4']
    #allocation6 [shape = 's32[2]{0}', space=sflag, size = 0x8, scoped, tag = 'scoped memory for _lambda_.1']
    #allocation7 [shape = 'u8[65536]{0}', space=vmem, size = 0x10000, scoped, tag = 'input window, operand 6']
    #allocation8 [shape = 's32[2]{0}', space=sflag, size = 0x8, scoped, tag = 'scoped memory for _lambda_.1']
    %22 = vsyncpa [#allocation6], 0
    %s23 = scalar_lea.sflag [#allocation6], 1
    %24 = vsyncpa %s23, 0
    %25 = vsyncpa [#allocation8], 0
    %s26 = scalar_lea.sflag [#allocation8], 1
    %27 = vsyncpa %s26, 0
    loop: start=0, step=1, limit=6
    $region2: #{_lambda_.1} parent=1 // loop_pre_header
      _
    $region3: #{_lambda_.1} parent=1 // loop_header
      %s29 = sphi 0, %s33
      %p30 = scmp.ge.s32.totalorder %s29, 6
      %s36 = sphi 0, %s55
      %s37 = sphi 0, %s51
      %s38 = sphi 0, %s47
      %s39 = sphi 0, %s36
      %s40 = sphi 0, %s37
      %s41 = sphi 0, %s38
      %s42 = sphi 0, %s39
      %s43 = sphi 0, %s40
      %s44 = sphi 0, %s41
      %s58 = sphi 0, %s60
      %s61 = sphi 0, %s58
      %s62 = sphi 0, %s61
      %s78 = sphi 0, %s62
      %s86 = sphi 0, %s88
      %s89 = sphi 0, %s86
      %s90 = sphi 0, %s89
      %s106 = sphi 0, %s90
      %s116 = sphi 0, %s118
      %s119 = sphi 0, %s116
      %s120 = sphi 0, %s119
      %s136 = sphi 0, %s120
      %s146 = sphi 0, %s148
      %s149 = sphi 0, %s146
      %s150 = sphi 0, %s149
      %s166 = sphi 0, %s150
      %s176 = sphi 0, %s178
      %s179 = sphi 0, %s176
      %s180 = sphi 0, %s179
      %s196 = sphi 0, %s180
      %s202 = sphi 0, %s204
      %s205 = sphi 0, %s202
      %s206 = sphi 0, %s205
      %s222 = sphi 0, %s206
    $region4: #{_lambda_.1} parent=1 // loop_header_branch
      %32 = sbr.rel (%p30) target = $region8
    $region5: #{_lambda_.1} parent=1 // loop_body
      %s34 = ssub.s32 %s29, 1
      %s35 = ssub.s32 %s29, 2
      %s45 = sadd.s32 1, %s38
      %p46 = scmp.ge.s32.totalorder %s45, 4
      %s47 = scalar_select %p46, 0, %s45
      %s48 = sadd.s32 1, %s37
      %s49 = scalar_select %p46, %s48, %s37
      %p50 = scmp.ge.s32.totalorder %s49, 1
      %s51 = scalar_select %p50, 0, %s49
      %s52 = sadd.s32 1, %s36
      %s53 = scalar_select %p50, %s52, %s36
      %p54 = scmp.ge.s32.totalorder %s53, 1
      %s55 = scalar_select %p54, 0, %s53
      %s56 = ssub.s32 %s36, %s55
      %p57 = scmp.eq.s32.totalorder %s56, 0
      %s59 = sadd.s32 %s58, 1
      %s60 = scalar_select %p57, %s58, %s59
      %p63 = pneg %p57
      %p64 = scmp.eq.s32.totalorder %s29, 3
      %p65 = por %p63, %p64
      %p66 = scmp.ne.s32.totalorder %s58, %s61
      %p67 = scmp.eq.s32.totalorder %s29, 0
      %p68 = por %p66, %p67
      %p69 = scmp.ne.s32.totalorder %s58, %s61
      %p70 = scmp.eq.s32.totalorder %s34, 3
      %p71 = por %p69, %p70
      %p72 = scmp.ne.s32.totalorder %s61, %s62
      %p73 = scmp.eq.s32.totalorder %s34, 0
      %p74 = por %p72, %p73
      %p75 = scmp.ne.s32.totalorder %s61, %s62
      %p76 = scmp.eq.s32.totalorder %s35, 3
      %p77 = por %p75, %p76
      %p79 = scmp.ne.s32.totalorder %s62, %s78
      %p80 = scmp.eq.s32.totalorder %s35, 0
      %p81 = por %p79, %p80
      %s82 = ssub.s32 %s38, %s47
      %s83 = ssub.s32 %s36, %s55
      %s84 = sor.u32 %s82, %s83
      %p85 = scmp.eq.s32.totalorder %s84, 0
      %s87 = sadd.s32 %s86, 1
      %s88 = scalar_select %p85, %s86, %s87
      %p91 = pneg %p85
      %p92 = scmp.eq.s32.totalorder %s29, 3
      %p93 = por %p91, %p92
      %p94 = scmp.ne.s32.totalorder %s86, %s89
      %p95 = scmp.eq.s32.totalorder %s29, 0
      %p96 = por %p94, %p95
      %p97 = scmp.ne.s32.totalorder %s86, %s89
      %p98 = scmp.eq.s32.totalorder %s34, 3
      %p99 = por %p97, %p98
      %p100 = scmp.ne.s32.totalorder %s89, %s90
      %p101 = scmp.eq.s32.totalorder %s34, 0
      %p102 = por %p100, %p101
      %p103 = scmp.ne.s32.totalorder %s89, %s90
      %p104 = scmp.eq.s32.totalorder %s35, 3
      %p105 = por %p103, %p104
      %p107 = scmp.ne.s32.totalorder %s90, %s106
      %p108 = scmp.eq.s32.totalorder %s35, 0
      %p109 = por %p107, %p108
      %s110 = sld [smem:[#allocation4 + %s38]]
      %s111 = sld [smem:[#allocation4 + %s47]]
      %s112 = ssub.s32 %s110, %s111
      %s113 = ssub.s32 %s37, %s51
      %s114 = sor.u32 %s112, %s113
      %p115 = scmp.eq.s32.totalorder %s114, 0
      %s117 = sadd.s32 %s116, 1
      %s118 = scalar_select %p115, %s116, %s117
      %p121 = pneg %p115
      %p122 = scmp.eq.s32.totalorder %s29, 3
      %p123 = por %p121, %p122
      %p124 = scmp.ne.s32.totalorder %s116, %s119
      %p125 = scmp.eq.s32.totalorder %s29, 0
      %p126 = por %p124, %p125
      %p127 = scmp.ne.s32.totalorder %s116, %s119
      %p128 = scmp.eq.s32.totalorder %s34, 3
      %p129 = por %p127, %p128
      %p130 = scmp.ne.s32.totalorder %s119, %s120
      %p131 = scmp.eq.s32.totalorder %s34, 0
      %p132 = por %p130, %p131
      %p133 = scmp.ne.s32.totalorder %s119, %s120
      %p134 = scmp.eq.s32.totalorder %s35, 3
      %p135 = por %p133, %p134
      %p137 = scmp.ne.s32.totalorder %s120, %s136
      %p138 = scmp.eq.s32.totalorder %s35, 0
      %p139 = por %p137, %p138
      %s140 = sld [smem:[#allocation4 + %s38]]
      %s141 = sld [smem:[#allocation4 + %s47]]
      %s142 = ssub.s32 %s140, %s141
      %s143 = ssub.s32 %s37, %s51
      %s144 = sor.u32 %s142, %s143
      %p145 = scmp.eq.s32.totalorder %s144, 0
      %s147 = sadd.s32 %s146, 1
      %s148 = scalar_select %p145, %s146, %s147
      %p151 = pneg %p145
      %p152 = scmp.eq.s32.totalorder %s29, 3
      %p153 = por %p151, %p152
      %p154 = scmp.ne.s32.totalorder %s146, %s149
      %p155 = scmp.eq.s32.totalorder %s29, 0
      %p156 = por %p154, %p155
      %p157 = scmp.ne.s32.totalorder %s146, %s149
      %p158 = scmp.eq.s32.totalorder %s34, 3
      %p159 = por %p157, %p158
      %p160 = scmp.ne.s32.totalorder %s149, %s150
      %p161 = scmp.eq.s32.totalorder %s34, 0
      %p162 = por %p160, %p161
      %p163 = scmp.ne.s32.totalorder %s149, %s150
      %p164 = scmp.eq.s32.totalorder %s35, 3
      %p165 = por %p163, %p164
      %p167 = scmp.ne.s32.totalorder %s150, %s166
      %p168 = scmp.eq.s32.totalorder %s35, 0
      %p169 = por %p167, %p168
      %s170 = sld [smem:[#allocation4 + %s38]]
      %s171 = sld [smem:[#allocation4 + %s47]]
      %s172 = ssub.s32 %s170, %s171
      %s173 = ssub.s32 %s37, %s51
      %s174 = sor.u32 %s172, %s173
      %p175 = scmp.eq.s32.totalorder %s174, 0
      %s177 = sadd.s32 %s176, 1
      %s178 = scalar_select %p175, %s176, %s177
      %p181 = pneg %p175
      %p182 = scmp.eq.s32.totalorder %s29, 3
      %p183 = por %p181, %p182
      %p184 = scmp.ne.s32.totalorder %s176, %s179
      %p185 = scmp.eq.s32.totalorder %s29, 0
      %p186 = por %p184, %p185
      %p187 = scmp.ne.s32.totalorder %s176, %s179
      %p188 = scmp.eq.s32.totalorder %s34, 3
      %p189 = por %p187, %p188
      %p190 = scmp.ne.s32.totalorder %s179, %s180
      %p191 = scmp.eq.s32.totalorder %s34, 0
      %p192 = por %p190, %p191
      %p193 = scmp.ne.s32.totalorder %s179, %s180
      %p194 = scmp.eq.s32.totalorder %s35, 3
      %p195 = por %p193, %p194
      %p197 = scmp.ne.s32.totalorder %s180, %s196
      %p198 = scmp.eq.s32.totalorder %s35, 0
      %p199 = por %p197, %p198
      %s200 = ssub.s32 %s36, %s55
      %p201 = scmp.eq.s32.totalorder %s200, 0
      %s203 = sadd.s32 %s202, 1
      %s204 = scalar_select %p201, %s202, %s203
      %p207 = pneg %p201
      %p208 = scmp.eq.s32.totalorder %s29, 3
      %p209 = por %p207, %p208
      %p210 = scmp.ne.s32.totalorder %s202, %s205
      %p211 = scmp.eq.s32.totalorder %s29, 0
      %p212 = por %p210, %p211
      %p213 = scmp.ne.s32.totalorder %s202, %s205
      %p214 = scmp.eq.s32.totalorder %s34, 3
      %p215 = por %p213, %p214
      %p216 = scmp.ne.s32.totalorder %s205, %s206
      %p217 = scmp.eq.s32.totalorder %s34, 0
      %p218 = por %p216, %p217
      %p219 = scmp.ne.s32.totalorder %s205, %s206
      %p220 = scmp.eq.s32.totalorder %s35, 3
      %p221 = por %p219, %p220
      %p223 = scmp.ne.s32.totalorder %s206, %s222
      %p224 = scmp.eq.s32.totalorder %s35, 0
      %p225 = por %p223, %p224
      %p226 = scmp.le.s32.totalorder 1, %s29
      %p227 = scmp.lt.s32.totalorder %s29, 5
      %p228 = pnand %p226, %p227
      %p229 = pneg %p228
      // Predicated region
      $region9: #{_lambda_.1} parent=5 // pred_check
        _
      $region10: #{_lambda_.1} parent=5 // pred_check_branch
        %231 = sbr.rel (%p228) target = $region12
      $region11: #{_lambda_.1} parent=5 // pred_region
        %s232 = ssub.s32 %s29, 1
        // Predicated region
        $region13: #{_lambda_.1} parent=11 // pred_check
          %p233 = pneg %p74
        $region14: #{_lambda_.1} parent=11 // pred_check_branch
          %235 = sbr.rel (%p233) target = $region16
        $region15: #{_lambda_.1} parent=11 // pred_region
          %s236 = smul.u32 2, %s39
          %p237 = scmp.lt.s32.totalorder %s236, 1
          %s238 = scalar_select %p237, %s236, 1
          %s239 = smul.addr %s238, 4
          %s240 = scalar_lea.vmem %s2, %s239
          %s241 = smul.u32 2, %s39
        $region16: #{_lambda_.1} parent=11 // pred_fallthru
          _
      $region12: #{_lambda_.1} parent=5 // pred_fallthru
        _
      %p242 = scmp.lt.s32.totalorder %s29, 4
      // Predicated region
      $region17: #{_lambda_.1} parent=5 // pred_check
        %p243 = pneg %p242
      $region18: #{_lambda_.1} parent=5 // pred_check_branch
        %245 = sbr.rel (%p243) target = $region20
      $region19: #{_lambda_.1} parent=5 // pred_region
        // Predicated region
        $region21: #{_lambda_.1} parent=19 // pred_check
          %p246 = pneg %p96
        $region22: #{_lambda_.1} parent=19 // pred_check_branch
          %248 = sbr.rel (%p246) target = $region24
        $region23: #{_lambda_.1} parent=19 // pred_region
          %s249 = smul.u32 2, %s36
          %p250 = scmp.lt.s32.totalorder %s38, 3
          %s251 = scalar_select %p250, %s38, 3
          %p252 = scmp.lt.s32.totalorder %s249, 1
          %s253 = scalar_select %p252, %s249, 1
          %s254 = smul.addr %s251, 2
          %s255 = sadd.s32 %s253, %s254
          %s256 = smul.addr %s255, 8
          %s257 = scalar_lea.vmem %s3, %s256
          %s258 = smul.u32 2, %s36
        $region24: #{_lambda_.1} parent=19 // pred_fallthru
          _
        // Predicated region
        $region25: #{_lambda_.1} parent=19 // pred_check
          %p259 = pneg %p126
        $region26: #{_lambda_.1} parent=19 // pred_check_branch
          %261 = sbr.rel (%p259) target = $region28
        $region27: #{_lambda_.1} parent=19 // pred_region
          %s262 = sand.u32 %s116, 1
          %s263 = scalar_lea.sflag [#allocation6], %s262
          %s264 = sand.u32 %s116, 1
          %s265 = smul.addr %s264, 64
          %s266 = scalar_lea.vmem [#allocation5], %s265
          %s267 = sld [smem:[#allocation4 + %s38]]
          %s269 = ssub.s32 1024, 1024
          %270 = vsyncadd %s263, %s269
          %s271 = smul.addr %s267, 16
          %s272 = sadd.s32 %s37, %s271
          %s273 = smul.addr %s272, 64
          %s274 = scalar_lea.hbm %s4, %s273
          %s275 = sshll.u32 %s266, 4
          %s276 = int_to_ptr.vmem [resolvable:$true] %s275
          %281 = dma.hbm_to_vmem [thread:$0]  %s274, 1024, %s276, %s263, 64, 64, 4
        $region28: #{_lambda_.1} parent=19 // pred_fallthru
          _
        // Predicated region
        $region29: #{_lambda_.1} parent=19 // pred_check
          %p282 = pneg %p156
        $region30: #{_lambda_.1} parent=19 // pred_check_branch
          %284 = sbr.rel (%p282) target = $region32
        $region31: #{_lambda_.1} parent=19 // pred_region
          %s285 = sld [smem:[#allocation4 + %s38]]
          %p286 = scmp.lt.s32.totalorder %s285, 3
          %s287 = scalar_select %p286, %s285, 3
          %p288 = scmp.lt.s32.totalorder %s37, 0
          %s289 = scalar_select %p288, %s37, 0
          %s290 = sadd.s32 %s289, %s287
          %s291 = scalar_lea.vmem %s5, %s290
          %s292 = sld [smem:[#allocation4 + %s38]]
        $region32: #{_lambda_.1} parent=19 // pred_fallthru
          _
        // Predicated region
        $region33: #{_lambda_.1} parent=19 // pred_check
          %p293 = pneg %p186
        $region34: #{_lambda_.1} parent=19 // pred_check_branch
          %295 = sbr.rel (%p293) target = $region36
        $region35: #{_lambda_.1} parent=19 // pred_region
          %s296 = sand.u32 %s176, 1
          %s297 = scalar_lea.sflag [#allocation8], %s296
          %s298 = sand.u32 %s176, 1
          %s299 = smul.addr %s298, 64
          %s300 = scalar_lea.vmem [#allocation7], %s299
          %s301 = sld [smem:[#allocation4 + %s38]]
          %s302 = smul.u32 16, %s37
          %s304 = ssub.s32 1024, 1024
          %305 = vsyncadd %s297, %s304
          %s306 = smul.addr %s301, 16
          %s307 = sadd.s32 %s302, %s306
          %s308 = smul.addr %s307, 64
          %s309 = scalar_lea.hbm %s6, %s308
          %s310 = sshll.u32 %s300, 4
          %s311 = int_to_ptr.vmem [resolvable:$true] %s310
          %316 = dma.hbm_to_vmem [thread:$0]  %s309, 1024, %s311, %s297, 64, 64, 4
        $region36: #{_lambda_.1} parent=19 // pred_fallthru
          _
      $region20: #{_lambda_.1} parent=5 // pred_fallthru
        _
      %p317 = scmp.le.s32.totalorder 1, %s29
      %p318 = scmp.lt.s32.totalorder %s29, 5
      %p319 = pnand %p317, %p318
      %p320 = pneg %p319
      // Predicated region
      $region37: #{_lambda_.1} parent=5 // pred_check
        _
      $region38: #{_lambda_.1} parent=5 // pred_check_branch
        %322 = sbr.rel (%p319) target = $region40
      $region39: #{_lambda_.1} parent=5 // pred_region
        %s323 = ssub.s32 %s29, 1
        %s324 = sand.u32 %s119, 1
        %s325 = scalar_lea.sflag [#allocation6], %s324
        %s326 = sand.u32 %s119, 1
        %s327 = smul.addr %s326, 64
        %s328 = scalar_lea.vmem [#allocation5], %s327
        // Predicated region
        $region41: #{_lambda_.1} parent=39 // pred_check
          %p329 = pneg %p132
        $region42: #{_lambda_.1} parent=39 // pred_check_branch
          %331 = sbr.rel (%p329) target = $region44
        $region43: #{_lambda_.1} parent=39 // pred_region
          %332 = dma.done %s325, 1024
        $region44: #{_lambda_.1} parent=39 // pred_fallthru
          _
        %s333 = sand.u32 %s179, 1
        %s334 = scalar_lea.sflag [#allocation8], %s333
        %s335 = sand.u32 %s179, 1
        %s336 = smul.addr %s335, 64
        %s337 = scalar_lea.vmem [#allocation7], %s336
        // Predicated region
        $region45: #{_lambda_.1} parent=39 // pred_check
          %p338 = pneg %p192
        $region46: #{_lambda_.1} parent=39 // pred_check_branch
          %340 = sbr.rel (%p338) target = $region48
        $region47: #{_lambda_.1} parent=39 // pred_region
          %341 = dma.done %s334, 1024
        $region48: #{_lambda_.1} parent=39 // pred_fallthru
          _
        %s342 = smul.u32 2, %s39
        %p343 = scmp.lt.s32.totalorder %s342, 1
        %s344 = scalar_select %p343, %s342, 1
        %s345 = smul.addr %s344, 4
        %s346 = scalar_lea.vmem %s2, %s345
        %p347 = pneg %p74
        %p348 = pneg %p71
        %s349 = smul.u32 2, %s39
        %p350 = scmp.lt.s32.totalorder %s41, 3
        %s351 = scalar_select %p350, %s41, 3
        %p352 = scmp.lt.s32.totalorder %s349, 1
        %s353 = scalar_select %p352, %s349, 1
        %s354 = smul.addr %s351, 2
        %s355 = sadd.s32 %s353, %s354
        %s356 = smul.addr %s355, 8
        %s357 = scalar_lea.vmem %s3, %s356
        %p358 = pneg %p102
        %p359 = pneg %p99
        %s360 = sand.u32 %s119, 1
        %s361 = scalar_lea.sflag [#allocation6], %s360
        %s362 = sand.u32 %s119, 1
        %s363 = smul.addr %s362, 64
        %s364 = scalar_lea.vmem [#allocation5], %s363
        %p365 = pneg %p132
        %p366 = pneg %p129
        %s367 = sld [smem:[#allocation4 + %s41]]
        %p368 = scmp.lt.s32.totalorder %s367, 3
        %s369 = scalar_select %p368, %s367, 3
        %p370 = scmp.lt.s32.totalorder %s40, 0
        %s371 = scalar_select %p370, %s40, 0
        %s372 = sadd.s32 %s371, %s369
        %s373 = scalar_lea.vmem %s5, %s372
        %p374 = pneg %p162
        %p375 = pneg %p159
        %s376 = sand.u32 %s179, 1
        %s377 = scalar_lea.sflag [#allocation8], %s376
        %s378 = sand.u32 %s179, 1
        %s379 = smul.addr %s378, 64
        %s380 = scalar_lea.vmem [#allocation7], %s379
        %p381 = pneg %p192
        %p382 = pneg %p189
        %p383 = pneg %p218
        %p384 = pneg %p215
        %s385 = smul.u32 2, %s39
        %p386 = scmp.lt.s32.totalorder %s385, 1
        %s387 = scalar_select %p386, %s385, 1
        %s388 = smul.addr %s387, 8
        %s389 = scalar_lea.vmem %s7, %s388
        %s390 = smul.u32 2, %s39
        %p391 = scmp.lt.s32.totalorder %s390, 1
        %s392 = scalar_select %p391, %s390, 1
        %s393 = smul.addr %s392, 4
        %s394 = scalar_lea.vmem %s2, %s393
        %s395 = smul.u32 2, %s39
        %s396 = smul.u32 2, %s39
        %p397 = scmp.lt.s32.totalorder %s41, 3
        %s398 = scalar_select %p397, %s41, 3
        %p399 = scmp.lt.s32.totalorder %s396, 1
        %s400 = scalar_select %p399, %s396, 1
        %s401 = smul.addr %s398, 2
        %s402 = sadd.s32 %s400, %s401
        %s403 = smul.addr %s402, 8
        %s404 = scalar_lea.vmem %s3, %s403
        %s405 = smul.u32 2, %s39
        %s406 = sld [smem:[#allocation4 + %s41]]
        %s407 = sld [smem:[#allocation4 + %s41]]
        %p408 = scmp.lt.s32.totalorder %s407, 3
        %s409 = scalar_select %p408, %s407, 3
        %p410 = scmp.lt.s32.totalorder %s40, 0
        %s411 = scalar_select %p410, %s40, 0
        %s412 = sadd.s32 %s411, %s409
        %s413 = scalar_lea.vmem %s5, %s412
        %s414 = sld [smem:[#allocation4 + %s41]]
        %s415 = sld [smem:[#allocation4 + %s41]]
        %s416 = smul.u32 16, %s40
        %s417 = smul.u32 2, %s39
        %p418 = scmp.lt.s32.totalorder %s417, 1
        %s419 = scalar_select %p418, %s417, 1
        %s420 = smul.addr %s419, 8
        %s421 = scalar_lea.vmem %s7, %s420
        %s422 = smul.u32 2, %s39
        %p428 = scmp.eq.s32.totalorder %s40, 0
        %p429 = scmp.eq.s32.totalorder %s41, 0
        %p430 = pnand %p428, %p429
        %p431 = pneg %p430
        // Predicated region
        $region49: #{_lambda_.1} parent=39 // pred_check
          _
        $region50: #{_lambda_.1} parent=39 // pred_check_branch
          %433 = sbr.rel (%p430) target = $region52
        $region51: #{_lambda_.1} parent=39 // pred_region
          %434 = vst [vmem:[%s421] sm:$0xff] 0.0
          %435 = vst [vmem:[%s421 + $0x8] sm:$0xff] 0.0
        $region52: #{_lambda_.1} parent=39 // pred_fallthru
          _
        %s436 = sld [smem:[#allocation3 + %s41]]
        %p437 = scmp.gt.s32.totalorder %s436, 0
        // Predicated region
        $region53: #{_lambda_.1} parent=39 // pred_check
          %p438 = pneg %p437
        $region54: #{_lambda_.1} parent=39 // pred_check_branch
          %440 = sbr.rel (%p438) target = $region56
        $region55: #{_lambda_.1} parent=39 // pred_region
          %v441 = vld [vmem:[%s394] sm:$0xf]
          %v442 = vld [vmem:[%s394 + $0x4] sm:$0xf]
          %v443 = vld [vmem:[%s328] sm:$0xf]
          %v444 = vld [vmem:[%s328 + $0x4] sm:$0xf]
          %v445 = vld [vmem:[%s328 + $0x8] sm:$0xf]
          %v446 = vld [vmem:[%s328 + $0xc] sm:$0xf]
          %v447 = vld [vmem:[%s328 + $0x10] sm:$0xf]
          %v448 = vld [vmem:[%s328 + $0x14] sm:$0xf]
          %v449 = vld [vmem:[%s328 + $0x18] sm:$0xf]
          %v450 = vld [vmem:[%s328 + $0x1c] sm:$0xf]
          %v451 = vld [vmem:[%s328 + $0x20] sm:$0xf]
          %v452 = vld [vmem:[%s328 + $0x24] sm:$0xf]
          %v453 = vld [vmem:[%s328 + $0x28] sm:$0xf]
          %v454 = vld [vmem:[%s328 + $0x2c] sm:$0xf]
          %v455 = vld [vmem:[%s328 + $0x30] sm:$0xf]
          %v456 = vld [vmem:[%s328 + $0x34] sm:$0xf]
          %v457 = vld [vmem:[%s328 + $0x38] sm:$0xf]
          %v458 = vld [vmem:[%s328 + $0x3c] sm:$0xf]
          %v459 = vld [vmem:[%s413] sm:$0x1]
          %v461 = vlaneseq
          %v462 = vshrl.u32 %v461, 7
          %v463 = vsub.s32 0, %v462
          %v464 = vrot.slane %v459, %v463
          %v468 = vunpack.c.l.b16 %v441
          %v469 = vunpack.c.l.b16 %v442
          %v470 = vpack.c.b16 %v469, %v468
          %v488 = vunpack.c.l.b16 %v443
          %v489 = vunpack.c.l.b16 %v444
          %v490 = vunpack.c.l.b16 %v445
          %v491 = vunpack.c.l.b16 %v446
          %v492 = vunpack.c.l.b16 %v447
          %v493 = vunpack.c.l.b16 %v448
          %v494 = vunpack.c.l.b16 %v449
          %v495 = vunpack.c.l.b16 %v450
          %v496 = vunpack.c.l.b16 %v451
          %v497 = vunpack.c.l.b16 %v452
          %v498 = vunpack.c.l.b16 %v453
          %v499 = vunpack.c.l.b16 %v454
          %v500 = vunpack.c.l.b16 %v455
          %v501 = vunpack.c.l.b16 %v456
          %v502 = vunpack.c.l.b16 %v457
          %v503 = vunpack.c.l.b16 %v458
          %v504 = vpack.c.b16 %v489, %v488
          %v505 = vpack.c.b16 %v491, %v490
          %v506 = vpack.c.b16 %v493, %v492
          %v507 = vpack.c.b16 %v495, %v494
          %v508 = vpack.c.b16 %v497, %v496
          %v509 = vpack.c.b16 %v499, %v498
          %v510 = vpack.c.b16 %v501, %v500
          %v511 = vpack.c.b16 %v503, %v502
          %520 = vmatprep.subr.bf16.mxu0 0
          %521 = vmatpush1.bf16.msra.mxu0 %v504
          %522 = vmatprep.subr.bf16.mxu0 0
          %523 = vmatpush1.bf16.msra.mxu0 %v505
          %524 = vmatprep.subr.bf16.mxu0 0
          %525 = vmatpush1.bf16.msra.mxu0 %v506
          %526 = vmatprep.subr.bf16.mxu0 0
          %527 = vmatpush1.bf16.msra.mxu0 %v507
          %528 = vmatprep.subr.bf16.mxu0 0
          %529 = vmatpush1.bf16.msra.mxu0 %v508
          %530 = vmatprep.subr.bf16.mxu0 0
          %531 = vmatpush1.bf16.msra.mxu0 %v509
          %532 = vmatprep.subr.bf16.mxu0 0
          %533 = vmatpush1.bf16.msra.mxu0 %v510
          %534 = vmatprep.subr.bf16.mxu0 0
          %535 = vmatpush1.bf16.msra.mxu0 %v511
          %536 = vmatprep.subr.bf16.mxu0 0
          %537 = vmatpush1.bf16.msra.mxu0 0
          %538 = vmatprep.subr.bf16.mxu0 0
          %539 = vmatpush1.bf16.msra.mxu0 0
          %540 = vmatprep.subr.bf16.mxu0 0
          %541 = vmatpush1.bf16.msra.mxu0 0
          %542 = vmatprep.subr.bf16.mxu0 0
          %543 = vmatpush1.bf16.msra.mxu0 0
          %544 = vmatprep.subr.bf16.mxu0 0
          %545 = vmatpush1.bf16.msra.mxu0 0
          %546 = vmatprep.subr.bf16.mxu0 0
          %547 = vmatpush1.bf16.msra.mxu0 0
          %548 = vmatprep.subr.bf16.mxu0 0
          %549 = vmatpush1.bf16.msra.mxu0 0
          %550 = vmatprep.subr.bf16.mxu0 0
          %551 = vmatpush1.bf16.msra.mxu0 0
          %552 = vmatprep.mubr.bf16.mxu0 0
          %553 = vmatmul.mubr.bf16.gmra.mrb[0].mxu0 %v470
          %v554 = vpop.f32.mrb[0].mxu0
          %v555 = vadd.f32 %v464, %v554
          %v556 = vpop.f32.mrb[0].mxu0
          %v557 = vpop.f32.mrb[0].mxu0
          %v558 = vadd.f32 %v464, %v557
          %v559 = vpop.f32.mrb[0].mxu0
          %560 = vdwg.mxu0
          %v561 = vpack.c.bf16 %v558, %v555
          %v562 = vmul.bf16 %v561, 1056980736
          %v563 = vmul.bf16 %v561, 1027030327
          %v564 = vmul.bf16 %v563, %v561
          %v565 = vmul.bf16 %v564, %v561
          %v566 = vadd.bf16 %v561, %v565
          %v567 = vmul.bf16 %v566, 1061961548
          %v568 = vtanh.bf16.pop %v567
          %v569 = vadd.bf16 %v568, 1065369472
          %v570 = vmul.bf16 %v562, %v569
          %v571 = vld [vmem:[%s337] sm:$0xf]
          %v572 = vld [vmem:[%s337 + $0x4] sm:$0xf]
          %v573 = vld [vmem:[%s337 + $0x8] sm:$0xf]
          %v574 = vld [vmem:[%s337 + $0xc] sm:$0xf]
          %v575 = vld [vmem:[%s337 + $0x10] sm:$0xf]
          %v576 = vld [vmem:[%s337 + $0x14] sm:$0xf]
          %v577 = vld [vmem:[%s337 + $0x18] sm:$0xf]
          %v578 = vld [vmem:[%s337 + $0x1c] sm:$0xf]
          %v579 = vld [vmem:[%s337 + $0x20] sm:$0xf]
          %v580 = vld [vmem:[%s337 + $0x24] sm:$0xf]
          %v581 = vld [vmem:[%s337 + $0x28] sm:$0xf]
          %v582 = vld [vmem:[%s337 + $0x2c] sm:$0xf]
          %v583 = vld [vmem:[%s337 + $0x30] sm:$0xf]
          %v584 = vld [vmem:[%s337 + $0x34] sm:$0xf]
          %v585 = vld [vmem:[%s337 + $0x38] sm:$0xf]
          %v586 = vld [vmem:[%s337 + $0x3c] sm:$0xf]
          %v603 = vunpack.c.l.b16 %v571
          %v604 = vunpack.c.l.b16 %v572
          %v605 = vunpack.c.l.b16 %v573
          %v606 = vunpack.c.l.b16 %v574
          %v607 = vunpack.c.l.b16 %v575
          %v608 = vunpack.c.l.b16 %v576
          %v609 = vunpack.c.l.b16 %v577
          %v610 = vunpack.c.l.b16 %v578
          %v611 = vunpack.c.l.b16 %v579
          %v612 = vunpack.c.l.b16 %v580
          %v613 = vunpack.c.l.b16 %v581
          %v614 = vunpack.c.l.b16 %v582
          %v615 = vunpack.c.l.b16 %v583
          %v616 = vunpack.c.l.b16 %v584
          %v617 = vunpack.c.l.b16 %v585
          %v618 = vunpack.c.l.b16 %v586
          %v619 = vpack.c.b16 %v604, %v603
          %v620 = vpack.c.b16 %v606, %v605
          %v621 = vpack.c.b16 %v608, %v607
          %v622 = vpack.c.b16 %v610, %v609
          %v623 = vpack.c.b16 %v612, %v611
          %v624 = vpack.c.b16 %v614, %v613
          %v625 = vpack.c.b16 %v616, %v615
          %v626 = vpack.c.b16 %v618, %v617
          %635 = vmatprep.subr.bf16.mxu0 0
          %636 = vmatpush1.bf16.msra.mxu0 %v619
          %637 = vmatprep.subr.bf16.mxu0 0
          %638 = vmatpush1.bf16.msra.mxu0 %v620
          %639 = vmatprep.subr.bf16.mxu0 0
          %640 = vmatpush1.bf16.msra.mxu0 %v621
          %641 = vmatprep.subr.bf16.mxu0 0
          %642 = vmatpush1.bf16.msra.mxu0 %v622
          %643 = vmatprep.subr.bf16.mxu0 0
          %644 = vmatpush1.bf16.msra.mxu0 %v623
          %645 = vmatprep.subr.bf16.mxu0 0
          %646 = vmatpush1.bf16.msra.mxu0 %v624
          %647 = vmatprep.subr.bf16.mxu0 0
          %648 = vmatpush1.bf16.msra.mxu0 %v625
          %649 = vmatprep.subr.bf16.mxu0 0
          %650 = vmatpush1.bf16.msra.mxu0 %v626
          %651 = vmatprep.subr.bf16.mxu0 0
          %652 = vmatpush1.bf16.msra.mxu0 0
          %653 = vmatprep.subr.bf16.mxu0 0
          %654 = vmatpush1.bf16.msra.mxu0 0
          %655 = vmatprep.subr.bf16.mxu0 0
          %656 = vmatpush1.bf16.msra.mxu0 0
          %657 = vmatprep.subr.bf16.mxu0 0
          %658 = vmatpush1.bf16.msra.mxu0 0
          %659 = vmatprep.subr.bf16.mxu0 0
          %660 = vmatpush1.bf16.msra.mxu0 0
          %661 = vmatprep.subr.bf16.mxu0 0
          %662 = vmatpush1.bf16.msra.mxu0 0
          %663 = vmatprep.subr.bf16.mxu0 0
          %664 = vmatpush1.bf16.msra.mxu0 0
          %665 = vmatprep.subr.bf16.mxu0 0
          %666 = vmatpush1.bf16.msra.mxu0 0
          %667 = vmatprep.mubr.bf16.mxu0 0
          %668 = vmatmul.mubr.bf16.gmra.mrb[0].mxu0 %v570
          %v669 = vpop.f32.mrb[0].mxu0
          %v670 = vadd.f32 0.0, %v669
          %v671 = vpop.f32.mrb[0].mxu0
          %v672 = vpop.f32.mrb[0].mxu0
          %v673 = vadd.f32 0.0, %v672
          %v674 = vpop.f32.mrb[0].mxu0
          %675 = vdwg.mxu0
          %v676 = vld [vmem:[%s404] sm:$0xff]
          %v677 = vld [vmem:[%s404 + $0x8] sm:$0xff]
          %v678 = vld [vmem:[%s421] sm:$0xff]
          %v679 = vld [vmem:[%s421 + $0x8] sm:$0xff]
          %681 = vset.pattern.permute.xlu0 0
          %682 = vperm.xlu0 %681, %v676
          %v683 = vpop.permute.xlu0 %682
          %686 = vset.pattern.permute.xlu0 0
          %687 = vperm.xlu0 %686, %v677
          %v688 = vpop.permute.xlu0 %687
          %v690 = vmul.f32 %v683, %v670
          %v691 = vmul.f32 %v688, %v673
          %v692 = vadd.f32 %v678, %v690
          %v693 = vadd.f32 %v679, %v691
          %694 = vst [vmem:[%s421] sm:$0xff] %v692
          %695 = vst [vmem:[%s421 + $0x8] sm:$0xff] %v693
        $region56: #{_lambda_.1} parent=39 // pred_fallthru
          _
        %s696 = smul.u32 2, %s39
        %p697 = scmp.lt.s32.totalorder %s696, 1
        %s698 = scalar_select %p697, %s696, 1
        %s699 = smul.addr %s698, 8
        %s700 = scalar_lea.vmem %s7, %s699
        // Predicated region
        $region57: #{_lambda_.1} parent=39 // pred_check
          %p701 = pneg %p215
        $region58: #{_lambda_.1} parent=39 // pred_check_branch
          %703 = sbr.rel (%p701) target = $region60
        $region59: #{_lambda_.1} parent=39 // pred_region
          %s704 = smul.u32 2, %s39
        $region60: #{_lambda_.1} parent=39 // pred_fallthru
          _
        // Predicated region
        $region61: #{_lambda_.1} parent=39 // pred_check
          %p705 = pneg %p215
        $region62: #{_lambda_.1} parent=39 // pred_check_branch
          %707 = sbr.rel (%p705) target = $region64
        $region63: #{_lambda_.1} parent=39 // pred_region
          %s708 = smul.u32 2, %s39
          %p709 = scmp.lt.s32.totalorder %s708, 1
          %s710 = scalar_select %p709, %s708, 1
          %s711 = smul.addr %s710, 8
          %s712 = scalar_lea.vmem %s7, %s711
        $region64: #{_lambda_.1} parent=39 // pred_fallthru
          _
      $region40: #{_lambda_.1} parent=5 // pred_fallthru
        _
      %p713 = scmp.le.s32.totalorder 2, %s29
      // Predicated region
      $region65: #{_lambda_.1} parent=5 // pred_check
        %p714 = pneg %p713
      $region66: #{_lambda_.1} parent=5 // pred_check_branch
        %716 = sbr.rel (%p714) target = $region68
      $region67: #{_lambda_.1} parent=5 // pred_region
        %s717 = ssub.s32 %s29, 2
      $region68: #{_lambda_.1} parent=5 // pred_fallthru
        _
    $region6: #{_lambda_.1} parent=1 // loop_footer
      %s33 = sadd.s32 1, %s29
    $region7: #{_lambda_.1} parent=1 // loop_footer_branch
      %28 = sbr.rel target = $region3
    $region8: #{_lambda_.1} parent=1 // loop_exit
      _
    %718 = vsyncpa [#allocation6], 1
    %s719 = scalar_lea.sflag [#allocation6], 1
    %720 = vsyncpa %s719, 1
    %721 = vsyncpa [#allocation8], 1
    %s722 = scalar_lea.sflag [#allocation8], 1
    %723 = vsyncpa %s722, 1

</llo_original>
